<compile_context>
chip_gen: v6e
topology: v6e:2x2x1
jax: 0.10.0
libtpu: 0.0.40
codegen_flags: <defaults>
</compile_context>

<pallas_src>
import math
import functools

import jax
import jax.numpy as jnp
from jax.experimental import pallas as pl
from jax.experimental.pallas import tpu as pltpu


def _seth_cnn_kernel(x_ref, w1_ref, b1_ref, w2_ref, b2_ref, out_ref, *, k, pad):
    bt, C, L = out_ref.shape        # output block (bt, C, L)
    btL, F = x_ref.shape            # flattened activations block (bt*L, F)
    H = b1_ref.shape[0]             # bottleneck dim
    cdt = w1_ref.dtype              # MXU compute dtype (bf16 by default)

    xf = x_ref[...].astype(cdt)                       # (bt*L, F)
    w1 = w1_ref[...]                                  # (k*H, F)   [t*H + j, f] = w1[t, f, j]
    b1 = b1_ref[...].astype(jnp.float32)              # (H, 1)
    w2 = w2_ref[...]                                  # (C, k*H)   [c, t*H + j] = w2[t, j, c]
    b2 = b2_ref[...].astype(jnp.float32)              # (C, 1)

    # conv1, all taps and all bt rows in one matmul:
    #   q[t*H + j, r] = sum_f w1[t, f, j] * x[r, f]          (r = flattened b*L + l)
    q = jax.lax.dot_general(w1, xf, (((1,), (1,)), ((), ())),
                            preferred_element_type=jnp.float32)    # (k*H, bt*L) f32

    # Position of each flattened row inside its length-L batch row.  Used to zero both
    # the conv padding fringe and the cross-batch-row positions after the lane roll.
    pos = jax.lax.broadcasted_iota(jnp.int32, (1, btL), 1) % L      # (1, bt*L)

    def tap(v, off):
        """v[:, r] -> v[:, r + off] within each length-L row, zero outside [0, L)."""
        if off == 0:
            return v
        rolled = pltpu.roll(v, (-off) % btL, axis=1)                # XLU lane rotation
        keep = jnp.logical_and(pos + off >= 0, pos + off < L)
        return jnp.where(keep, rolled, 0.0)

    # Accumulate the k shifted tap contributions (VPU adds; rolls ride the XLU slot).
    h_pre = b1
    for t in range(k):
        h_pre = h_pre + tap(q[t * H:(t + 1) * H, :], t - pad)
    h = jnp.tanh(h_pre)                                             # (H, bt*L) f32, lane-dense

    # conv2 im2col built in-register: sublane-aligned concat of lane-rolled copies of h.
    s2 = jnp.concatenate([tap(h, t - pad) for t in range(k)], axis=0)   # (k*H, bt*L)
    y = jax.lax.dot_general(w2, s2.astype(cdt), (((1,), (0,)), ((), ())),
                            preferred_element_type=jnp.float32) + b2    # (C, bt*L) f32

    # Single lane-dense store of the whole (bt, C, L) output block (L on lanes).
    out_ref[...] = jnp.stack(
        [y[:, b * L:(b + 1) * L] for b in range(bt)], axis=0).astype(out_ref.dtype)


def _pick_block_b(B, cap=8):
    """Largest divisor of B <= cap, preferring >= 2 grid steps (v7x megacore, pipelining)."""
    bt = min(B, cap)
    if B >= 2:
        bt = min(bt, B // 2)          # keep at least two grid steps
    bt = max(bt, 1)
    while B % bt:
        bt -= 1
    return bt


def seth_cnn_forward(x, params, kernel_n, *, block_b=None,
                     compute_dtype=jnp.bfloat16, out_dtype=jnp.float32):
    """x: (B, L, F). Returns (B, n_classes, L), matching the PyTorch module."""
    w1, b1, w2, b2 = params           # w1:(k,F,H) b1:(1,H) w2:(k,H,C) b2:(1,C)
    B, L, F = x.shape
    k = kernel_n
    assert k % 2 == 1, "odd kernel_n assumed (same-length conv, like the PyTorch module)"
    pad = k // 2
    H = w1.shape[2]
    C = w2.shape[2]

    bt = block_b if block_b is not None else _pick_block_b(B)
    assert B % bt == 0, f"block_b={bt} must divide batch {B}"
    if (bt * L) % 8 != 0 and bt != B:
        bt = B                        # keep the (8,128) tiling rule on the (bt*L, F) block

    # Channel-major / tap-flattened weights for the fused matmuls (tiny one-time reshapes).
    w1_cm = jnp.transpose(w1, (0, 2, 1)).reshape(k * H, F).astype(compute_dtype)
    b1_cm = b1.reshape(H, 1).astype(jnp.float32)
    w2_cm = w2.reshape(k * H, C).T.astype(compute_dtype)
    b2_cm = b2.reshape(C, 1).astype(jnp.float32)
    x2 = x.reshape(B * L, F)          # free row-major collapse; kernel casts to compute_dtype

    grid = (B // bt,)

    # Explicit VMEM budget: double-buffered in/out blocks + in-register/f32 intermediates,
    # floored at the default scoped limit and capped below v7x's 64 MiB physical VMEM.
    blk_bytes = (bt * L * F * x2.dtype.itemsize
                 + bt * C * L * jnp.dtype(out_dtype).itemsize)
    interm_bytes = bt * L * (k * H) * 4 * 3
    w_bytes = (k * H * (F + C) + H + C) * 4
    vmem_limit = int(min(48 * 2**20,
                         max(32 * 2**20,
                             4 * blk_bytes + interm_bytes + w_bytes + (2 << 20))))

    out = pl.pallas_call(
        functools.partial(_seth_cnn_kernel, k=k, pad=pad),
        out_shape=jax.ShapeDtypeStruct((B, C, L), out_dtype),
        grid_spec=pltpu.PrefetchScalarGridSpec(
            num_scalar_prefetch=0,
            grid=grid,                                            # batch-row tiles
            in_specs=[
                pl.BlockSpec((bt * L, F), lambda i: (i, 0)),      # activations, flattened rows
                pl.BlockSpec((k * H, F),  lambda i: (0, 0)),      # conv1 weights (tap/chan major)
                pl.BlockSpec((H, 1),      lambda i: (0, 0)),      # conv1 bias (channel-major)
                pl.BlockSpec((C, k * H),  lambda i: (0, 0)),      # conv2 weights (chan major)
                pl.BlockSpec((C, 1),      lambda i: (0, 0)),      # conv2 bias
            ],
            out_specs=pl.BlockSpec((bt, C, L), lambda i: (i, 0, 0)),  # L = lane axis
        ),
        compiler_params=pltpu.CompilerParams(
            dimension_semantics=("parallel",),                    # independent batch tiles
            vmem_limit_bytes=vmem_limit),
    )(x2, w1_cm, b1_cm, w2_cm, b2_cm)

    return out  # (B, C, L)


def init_params(key, n_features, bottleneck_dim, n_classes, kernel_n):
    """Deterministic init mimicking PyTorch Conv2d default (uniform +/- 1/sqrt(fan_in))."""
    k = kernel_n
    k1, k2, k3, k4 = jax.random.split(key, 4)
    bound1 = 1.0 / math.sqrt(n_features * k * 1)
    bound2 = 1.0 / math.sqrt(bottleneck_dim * k * 1)
    # Stored in (k, C_in, C_out) layout; equivalent to a transposed PyTorch Conv2d
    # weight of shape (C_out, C_in, k, 1).
    w1 = jax.random.uniform(k1, (k, n_features, bottleneck_dim), jnp.float32,
                            -bound1, bound1)
    b1 = jax.random.uniform(k2, (1, bottleneck_dim), jnp.float32, -bound1, bound1)
    w2 = jax.random.uniform(k3, (k, bottleneck_dim, n_classes), jnp.float32,
                            -bound2, bound2)
    b2 = jax.random.uniform(k4, (1, n_classes), jnp.float32, -bound2, bound2)
    return (w1, b1, w2, b2)


def ref_forward(x, params, kernel_n):
    """Pure-JAX reference (same math as the PyTorch module) for the correctness check."""
    w1, b1, w2, b2 = [p.astype(jnp.float32) for p in params]
    x = x.astype(jnp.float32)
    k = kernel_n
    pad = k // 2
    B, L, F = x.shape
    xpad = jnp.pad(x, ((0, 0), (pad, pad), (0, 0)))
    h = sum(jnp.einsum('blf,fh->blh', xpad[:, t:t + L, :], w1[t]) for t in range(k)) + b1
    h = jnp.tanh(h)
    hpad = jnp.pad(h, ((0, 0), (pad, pad), (0, 0)))
    y = sum(jnp.einsum('blh,hc->blc', hpad[:, t:t + L, :], w2[t]) for t in range(k)) + b2
    return jnp.transpose(y, (0, 2, 1))


if __name__ == "__main__":
    # Small shapes consistent with the module's forward: x is (B, L, F).
    n_classes = 1
    n_features = 32
    bottleneck_dim = 16
    kernel_n = 5
    B, L = 4, 128

    key = jax.random.PRNGKey(0)
    kx, kp = jax.random.split(key)
    # bf16 activations / params: halves HBM traffic, full-rate MXU path.
    x = jax.random.normal(kx, (B, L, n_features), jnp.float32).astype(jnp.bfloat16)
    params = init_params(kp, n_features, bottleneck_dim, n_classes, kernel_n)
    params = tuple(p.astype(jnp.bfloat16) for p in params)

    y = seth_cnn_forward(x, params, kernel_n)
    y = jax.block_until_ready(y)

    y_ref = ref_forward(x, params, kernel_n)
    assert y.shape == (B, n_classes, L), y.shape
    # bf16 MXU operands / bf16-rounded hidden activations -> compare at bf16 tolerance.
    assert jnp.allclose(y, y_ref, atol=3e-2, rtol=3e-2), \
        float(jnp.max(jnp.abs(y - y_ref)))

    print("KERNEL_OK")
</pallas_src>

<mosaic_0001>
module attributes {stable_mosaic.version = 11 : i64} {
  func.func @_seth_cnn_kernel(%arg0: i32, %arg1: memref<256x32xbf16, #tpu.memory_space<vmem>>, %arg2: memref<80x32xbf16, #tpu.memory_space<vmem>>, %arg3: memref<16x1xf32, #tpu.memory_space<vmem>>, %arg4: memref<1x80xbf16, #tpu.memory_space<vmem>>, %arg5: memref<1x1xf32, #tpu.memory_space<vmem>>, %arg6: memref<2x1x128xf32, #tpu.memory_space<vmem>>) attributes {dimension_semantics = [#tpu.dimension_semantics<parallel>], iteration_bounds = array<i64: 2>, scalar_prefetch = 0 : i64, scratch_operands = 0 : i64, tpu.core_type = #tpu.core_type<tc>, window_params = [{transform_indices = @transform_0, window_bounds = array<i64: 256, 32>}, {pipeline_mode = #tpu.pipeline_mode<synchronous>, transform_indices = @transform_1, window_bounds = array<i64: 80, 32>}, {pipeline_mode = #tpu.pipeline_mode<synchronous>, transform_indices = @transform_2, window_bounds = array<i64: 16, 1>}, {pipeline_mode = #tpu.pipeline_mode<synchronous>, transform_indices = @transform_3, window_bounds = array<i64: 1, 80>}, {pipeline_mode = #tpu.pipeline_mode<synchronous>, transform_indices = @transform_4, window_bounds = array<i64: 1, 1>}, {transform_indices = @transform_5, window_bounds = array<i64: 2, 1, 128>}]} {
    %c0 = arith.constant 0 : index
    %c0_0 = arith.constant 0 : index
    %0 = vector.load %arg1[%c0, %c0_0] : memref<256x32xbf16, #tpu.memory_space<vmem>>, vector<256x32xbf16>
    %c0_1 = arith.constant 0 : index
    %c0_2 = arith.constant 0 : index
    %1 = vector.load %arg2[%c0_1, %c0_2] : memref<80x32xbf16, #tpu.memory_space<vmem>>, vector<80x32xbf16>
    %c0_3 = arith.constant 0 : index
    %c0_4 = arith.constant 0 : index
    %2 = vector.load %arg3[%c0_3, %c0_4] : memref<16x1xf32, #tpu.memory_space<vmem>>, vector<16x1xf32>
    %c0_5 = arith.constant 0 : index
    %c0_6 = arith.constant 0 : index
    %3 = vector.load %arg4[%c0_5, %c0_6] : memref<1x80xbf16, #tpu.memory_space<vmem>>, vector<1x80xbf16>
    %c0_7 = arith.constant 0 : index
    %c0_8 = arith.constant 0 : index
    %4 = vector.load %arg5[%c0_7, %c0_8] : memref<1x1xf32, #tpu.memory_space<vmem>>, vector<1x1xf32>
    %cst = arith.constant dense<0.000000e+00> : vector<80x256xf32>
    %5 = tpu.matmul %1, %0, %cst {dimension_numbers = #tpu.dot_dimension_numbers<[1], [1], [0], [0], [0, 0, 1, 0], [], []>} : vector<80x32xbf16>, vector<256x32xbf16>, vector<80x256xf32> -> vector<80x256xf32>
    %6 = tpu.iota {dimensions = array<i32: 1>} : vector<1x256xi32>
    %c128_i32 = arith.constant 128 : i32
    %c0_i32 = arith.constant 0 : i32
    %7 = arith.cmpi eq, %c128_i32, %c0_i32 : i32
    %c1_i32 = arith.constant 1 : i32
    %8 = arith.select %7, %c1_i32, %c128_i32 : i32
    %9 = vector.broadcast %8 : i32 to vector<1x256xi32>
    %10 = arith.remsi %6, %9 : vector<1x256xi32>
    %c0_i32_9 = arith.constant 0 : i32
    %11 = vector.broadcast %c0_i32_9 : i32 to vector<1x256xi32>
    %12 = arith.cmpi ne, %10, %11 : vector<1x256xi32>
    %c0_i32_10 = arith.constant 0 : i32
    %13 = vector.broadcast %c0_i32_10 : i32 to vector<1x256xi32>
    %14 = arith.cmpi slt, %10, %13 : vector<1x256xi32>
    %c0_i32_11 = arith.constant 0 : i32
    %15 = arith.cmpi slt, %8, %c0_i32_11 : i32
    %16 = vector.broadcast %15 : i1 to vector<1x256xi1>
    %17 = vector.broadcast %16 : vector<1x256xi1> to vector<1x256xi1>
    %18 = arith.xori %14, %17 : vector<1x256xi1>
    %19 = arith.andi %18, %12 : vector<1x256xi1>
    %20 = vector.broadcast %8 : i32 to vector<1x256xi32>
    %21 = arith.addi %10, %20 : vector<1x256xi32>
    %22 = arith.select %19, %21, %10 : vector<1x256xi1>, vector<1x256xi32>
    %23 = vector.extract_strided_slice %5 {offsets = [0, 0], sizes = [16, 256], strides = [1, 1]} : vector<80x256xf32> to vector<16x256xf32>
    %c2_i32 = arith.constant 2 : i32
    %24 = tpu.dynamic_rotate %23 by %c2_i32 dim 1 : vector<16x256xf32>, i32 -> vector<16x256xf32>
    %c-2_i32 = arith.constant -2 : i32
    %25 = vector.broadcast %c-2_i32 : i32 to vector<1x256xi32>
    %26 = arith.addi %22, %25 : vector<1x256xi32>
    %c0_i32_12 = arith.constant 0 : i32
    %27 = vector.broadcast %c0_i32_12 : i32 to vector<1x256xi32>
    %28 = arith.cmpi sge, %26, %27 : vector<1x256xi32>
    %c-2_i32_13 = arith.constant -2 : i32
    %29 = vector.broadcast %c-2_i32_13 : i32 to vector<1x256xi32>
    %30 = arith.addi %22, %29 : vector<1x256xi32>
    %c128_i32_14 = arith.constant 128 : i32
    %31 = vector.broadcast %c128_i32_14 : i32 to vector<1x256xi32>
    %32 = arith.cmpi slt, %30, %31 : vector<1x256xi32>
    %33 = arith.andi %28, %32 : vector<1x256xi1>
    %cst_15 = arith.constant 0.000000e+00 : f32
    %34 = vector.shape_cast %33 : vector<1x256xi1> to vector<1x256xi1>
    %35 = vector.broadcast %34 : vector<1x256xi1> to vector<16x256xi1>
    %36 = vector.broadcast %cst_15 : f32 to vector<16x256xf32>
    %37 = arith.select %35, %24, %36 : vector<16x256xi1>, vector<16x256xf32>
    %38 = vector.broadcast %2 : vector<16x1xf32> to vector<16x256xf32>
    %39 = arith.addf %38, %37 : vector<16x256xf32>
    %40 = vector.extract_strided_slice %5 {offsets = [16, 0], sizes = [16, 256], strides = [1, 1]} : vector<80x256xf32> to vector<16x256xf32>
    %c1_i32_16 = arith.constant 1 : i32
    %41 = tpu.dynamic_rotate %40 by %c1_i32_16 dim 1 : vector<16x256xf32>, i32 -> vector<16x256xf32>
    %c-1_i32 = arith.constant -1 : i32
    %42 = vector.broadcast %c-1_i32 : i32 to vector<1x256xi32>
    %43 = arith.addi %22, %42 : vector<1x256xi32>
    %c0_i32_17 = arith.constant 0 : i32
    %44 = vector.broadcast %c0_i32_17 : i32 to vector<1x256xi32>
    %45 = arith.cmpi sge, %43, %44 : vector<1x256xi32>
    %c-1_i32_18 = arith.constant -1 : i32
    %46 = vector.broadcast %c-1_i32_18 : i32 to vector<1x256xi32>
    %47 = arith.addi %22, %46 : vector<1x256xi32>
    %c128_i32_19 = arith.constant 128 : i32
    %48 = vector.broadcast %c128_i32_19 : i32 to vector<1x256xi32>
    %49 = arith.cmpi slt, %47, %48 : vector<1x256xi32>
    %50 = arith.andi %45, %49 : vector<1x256xi1>
    %cst_20 = arith.constant 0.000000e+00 : f32
    %51 = vector.shape_cast %50 : vector<1x256xi1> to vector<1x256xi1>
    %52 = vector.broadcast %51 : vector<1x256xi1> to vector<16x256xi1>
    %53 = vector.broadcast %cst_20 : f32 to vector<16x256xf32>
    %54 = arith.select %52, %41, %53 : vector<16x256xi1>, vector<16x256xf32>
    %55 = arith.addf %39, %54 : vector<16x256xf32>
    %56 = vector.extract_strided_slice %5 {offsets = [32, 0], sizes = [16, 256], strides = [1, 1]} : vector<80x256xf32> to vector<16x256xf32>
    %57 = arith.addf %55, %56 : vector<16x256xf32>
    %58 = vector.extract_strided_slice %5 {offsets = [48, 0], sizes = [16, 256], strides = [1, 1]} : vector<80x256xf32> to vector<16x256xf32>
    %c255_i32 = arith.constant 255 : i32
    %59 = tpu.dynamic_rotate %58 by %c255_i32 dim 1 : vector<16x256xf32>, i32 -> vector<16x256xf32>
    %c1_i32_21 = arith.constant 1 : i32
    %60 = vector.broadcast %c1_i32_21 : i32 to vector<1x256xi32>
    %61 = arith.addi %22, %60 : vector<1x256xi32>
    %c0_i32_22 = arith.constant 0 : i32
    %62 = vector.broadcast %c0_i32_22 : i32 to vector<1x256xi32>
    %63 = arith.cmpi sge, %61, %62 : vector<1x256xi32>
    %c1_i32_23 = arith.constant 1 : i32
    %64 = vector.broadcast %c1_i32_23 : i32 to vector<1x256xi32>
    %65 = arith.addi %22, %64 : vector<1x256xi32>
    %c128_i32_24 = arith.constant 128 : i32
    %66 = vector.broadcast %c128_i32_24 : i32 to vector<1x256xi32>
    %67 = arith.cmpi slt, %65, %66 : vector<1x256xi32>
    %68 = arith.andi %63, %67 : vector<1x256xi1>
    %cst_25 = arith.constant 0.000000e+00 : f32
    %69 = vector.shape_cast %68 : vector<1x256xi1> to vector<1x256xi1>
    %70 = vector.broadcast %69 : vector<1x256xi1> to vector<16x256xi1>
    %71 = vector.broadcast %cst_25 : f32 to vector<16x256xf32>
    %72 = arith.select %70, %59, %71 : vector<16x256xi1>, vector<16x256xf32>
    %73 = arith.addf %57, %72 : vector<16x256xf32>
    %74 = vector.extract_strided_slice %5 {offsets = [64, 0], sizes = [16, 256], strides = [1, 1]} : vector<80x256xf32> to vector<16x256xf32>
    %c254_i32 = arith.constant 254 : i32
    %75 = tpu.dynamic_rotate %74 by %c254_i32 dim 1 : vector<16x256xf32>, i32 -> vector<16x256xf32>
    %c2_i32_26 = arith.constant 2 : i32
    %76 = vector.broadcast %c2_i32_26 : i32 to vector<1x256xi32>
    %77 = arith.addi %22, %76 : vector<1x256xi32>
    %c0_i32_27 = arith.constant 0 : i32
    %78 = vector.broadcast %c0_i32_27 : i32 to vector<1x256xi32>
    %79 = arith.cmpi sge, %77, %78 : vector<1x256xi32>
    %c2_i32_28 = arith.constant 2 : i32
    %80 = vector.broadcast %c2_i32_28 : i32 to vector<1x256xi32>
    %81 = arith.addi %22, %80 : vector<1x256xi32>
    %c128_i32_29 = arith.constant 128 : i32
    %82 = vector.broadcast %c128_i32_29 : i32 to vector<1x256xi32>
    %83 = arith.cmpi slt, %81, %82 : vector<1x256xi32>
    %84 = arith.andi %79, %83 : vector<1x256xi1>
    %cst_30 = arith.constant 0.000000e+00 : f32
    %85 = vector.shape_cast %84 : vector<1x256xi1> to vector<1x256xi1>
    %86 = vector.broadcast %85 : vector<1x256xi1> to vector<16x256xi1>
    %87 = vector.broadcast %cst_30 : f32 to vector<16x256xf32>
    %88 = arith.select %86, %75, %87 : vector<16x256xi1>, vector<16x256xf32>
    %89 = arith.addf %73, %88 : vector<16x256xf32>
    %90 = math.tanh %89 : vector<16x256xf32>
    %c2_i32_31 = arith.constant 2 : i32
    %91 = tpu.dynamic_rotate %90 by %c2_i32_31 dim 1 : vector<16x256xf32>, i32 -> vector<16x256xf32>
    %c-2_i32_32 = arith.constant -2 : i32
    %92 = vector.broadcast %c-2_i32_32 : i32 to vector<1x256xi32>
    %93 = arith.addi %22, %92 : vector<1x256xi32>
    %c0_i32_33 = arith.constant 0 : i32
    %94 = vector.broadcast %c0_i32_33 : i32 to vector<1x256xi32>
    %95 = arith.cmpi sge, %93, %94 : vector<1x256xi32>
    %c-2_i32_34 = arith.constant -2 : i32
    %96 = vector.broadcast %c-2_i32_34 : i32 to vector<1x256xi32>
    %97 = arith.addi %22, %96 : vector<1x256xi32>
    %c128_i32_35 = arith.constant 128 : i32
    %98 = vector.broadcast %c128_i32_35 : i32 to vector<1x256xi32>
    %99 = arith.cmpi slt, %97, %98 : vector<1x256xi32>
    %100 = arith.andi %95, %99 : vector<1x256xi1>
    %cst_36 = arith.constant 0.000000e+00 : f32
    %101 = vector.shape_cast %100 : vector<1x256xi1> to vector<1x256xi1>
    %102 = vector.broadcast %101 : vector<1x256xi1> to vector<16x256xi1>
    %103 = vector.broadcast %cst_36 : f32 to vector<16x256xf32>
    %104 = arith.select %102, %91, %103 : vector<16x256xi1>, vector<16x256xf32>
    %c1_i32_37 = arith.constant 1 : i32
    %105 = tpu.dynamic_rotate %90 by %c1_i32_37 dim 1 : vector<16x256xf32>, i32 -> vector<16x256xf32>
    %c-1_i32_38 = arith.constant -1 : i32
    %106 = vector.broadcast %c-1_i32_38 : i32 to vector<1x256xi32>
    %107 = arith.addi %22, %106 : vector<1x256xi32>
    %c0_i32_39 = arith.constant 0 : i32
    %108 = vector.broadcast %c0_i32_39 : i32 to vector<1x256xi32>
    %109 = arith.cmpi sge, %107, %108 : vector<1x256xi32>
    %c-1_i32_40 = arith.constant -1 : i32
    %110 = vector.broadcast %c-1_i32_40 : i32 to vector<1x256xi32>
    %111 = arith.addi %22, %110 : vector<1x256xi32>
    %c128_i32_41 = arith.constant 128 : i32
    %112 = vector.broadcast %c128_i32_41 : i32 to vector<1x256xi32>
    %113 = arith.cmpi slt, %111, %112 : vector<1x256xi32>
    %114 = arith.andi %109, %113 : vector<1x256xi1>
    %cst_42 = arith.constant 0.000000e+00 : f32
    %115 = vector.shape_cast %114 : vector<1x256xi1> to vector<1x256xi1>
    %116 = vector.broadcast %115 : vector<1x256xi1> to vector<16x256xi1>
    %117 = vector.broadcast %cst_42 : f32 to vector<16x256xf32>
    %118 = arith.select %116, %105, %117 : vector<16x256xi1>, vector<16x256xf32>
    %c255_i32_43 = arith.constant 255 : i32
    %119 = tpu.dynamic_rotate %90 by %c255_i32_43 dim 1 : vector<16x256xf32>, i32 -> vector<16x256xf32>
    %c1_i32_44 = arith.constant 1 : i32
    %120 = vector.broadcast %c1_i32_44 : i32 to vector<1x256xi32>
    %121 = arith.addi %22, %120 : vector<1x256xi32>
    %c0_i32_45 = arith.constant 0 : i32
    %122 = vector.broadcast %c0_i32_45 : i32 to vector<1x256xi32>
    %123 = arith.cmpi sge, %121, %122 : vector<1x256xi32>
    %c1_i32_46 = arith.constant 1 : i32
    %124 = vector.broadcast %c1_i32_46 : i32 to vector<1x256xi32>
    %125 = arith.addi %22, %124 : vector<1x256xi32>
    %c128_i32_47 = arith.constant 128 : i32
    %126 = vector.broadcast %c128_i32_47 : i32 to vector<1x256xi32>
    %127 = arith.cmpi slt, %125, %126 : vector<1x256xi32>
    %128 = arith.andi %123, %127 : vector<1x256xi1>
    %cst_48 = arith.constant 0.000000e+00 : f32
    %129 = vector.shape_cast %128 : vector<1x256xi1> to vector<1x256xi1>
    %130 = vector.broadcast %129 : vector<1x256xi1> to vector<16x256xi1>
    %131 = vector.broadcast %cst_48 : f32 to vector<16x256xf32>
    %132 = arith.select %130, %119, %131 : vector<16x256xi1>, vector<16x256xf32>
    %c254_i32_49 = arith.constant 254 : i32
    %133 = tpu.dynamic_rotate %90 by %c254_i32_49 dim 1 : vector<16x256xf32>, i32 -> vector<16x256xf32>
    %c2_i32_50 = arith.constant 2 : i32
    %134 = vector.broadcast %c2_i32_50 : i32 to vector<1x256xi32>
    %135 = arith.addi %22, %134 : vector<1x256xi32>
    %c0_i32_51 = arith.constant 0 : i32
    %136 = vector.broadcast %c0_i32_51 : i32 to vector<1x256xi32>
    %137 = arith.cmpi sge, %135, %136 : vector<1x256xi32>
    %c2_i32_52 = arith.constant 2 : i32
    %138 = vector.broadcast %c2_i32_52 : i32 to vector<1x256xi32>
    %139 = arith.addi %22, %138 : vector<1x256xi32>
    %c128_i32_53 = arith.constant 128 : i32
    %140 = vector.broadcast %c128_i32_53 : i32 to vector<1x256xi32>
    %141 = arith.cmpi slt, %139, %140 : vector<1x256xi32>
    %142 = arith.andi %137, %141 : vector<1x256xi1>
    %cst_54 = arith.constant 0.000000e+00 : f32
    %143 = vector.shape_cast %142 : vector<1x256xi1> to vector<1x256xi1>
    %144 = vector.broadcast %143 : vector<1x256xi1> to vector<16x256xi1>
    %145 = vector.broadcast %cst_54 : f32 to vector<16x256xf32>
    %146 = arith.select %144, %133, %145 : vector<16x256xi1>, vector<16x256xf32>
    %147 = tpu.concatenate %104, %118, %90, %132, %146 in 0 : vector<16x256xf32>, vector<16x256xf32>, vector<16x256xf32>, vector<16x256xf32>, vector<16x256xf32> -> vector<80x256xf32>
    %148 = arith.truncf %147 : vector<80x256xf32> to vector<80x256xbf16>
    %cst_55 = arith.constant dense<0.000000e+00> : vector<1x256xf32>
    %149 = tpu.matmul %3, %148, %cst_55 {dimension_numbers = #tpu.dot_dimension_numbers<[1], [0], [0], [1], [0, 0, 1, 1], [], []>} : vector<1x80xbf16>, vector<80x256xbf16>, vector<1x256xf32> -> vector<1x256xf32>
    %150 = vector.broadcast %4 : vector<1x1xf32> to vector<1x256xf32>
    %151 = arith.addf %149, %150 : vector<1x256xf32>
    %152 = vector.extract_strided_slice %151 {offsets = [0, 0], sizes = [1, 128], strides = [1, 1]} : vector<1x256xf32> to vector<1x128xf32>
    %153 = vector.extract_strided_slice %151 {offsets = [0, 128], sizes = [1, 128], strides = [1, 1]} : vector<1x256xf32> to vector<1x128xf32>
    %154 = vector.shape_cast %152 : vector<1x128xf32> to vector<1x1x128xf32>
    %155 = vector.shape_cast %153 : vector<1x128xf32> to vector<1x1x128xf32>
    %156 = tpu.concatenate %154, %155 in 0 : vector<1x1x128xf32>, vector<1x1x128xf32> -> vector<2x1x128xf32>
    %c0_56 = arith.constant 0 : index
    %c0_57 = arith.constant 0 : index
    %c0_58 = arith.constant 0 : index
    %157 = vector.load %arg6[%c0_56, %c0_57, %c0_58] : memref<2x1x128xf32, #tpu.memory_space<vmem>>, vector<2x1x128xf32>
    tpu.vector_store %arg6[%c0_56, %c0_57, %c0_58], %156 {strides = array<i32>} : memref<2x1x128xf32, #tpu.memory_space<vmem>>, vector<2x1x128xf32>,
    return
  }
  func.func @transform_0(%arg0: i32) -> (i32, i32) {
    %c0_i32 = arith.constant 0 : i32
    %c0_i32_0 = arith.constant 0 : i32
    return %arg0, %c0_i32 : i32, i32
  }
  func.func @transform_1(%arg0: i32) -> (i32, i32) {
    %c0_i32 = arith.constant 0 : i32
    %c0_i32_0 = arith.constant 0 : i32
    %c0_i32_1 = arith.constant 0 : i32
    return %c0_i32, %c0_i32_0 : i32, i32
  }
  func.func @transform_2(%arg0: i32) -> (i32, i32) {
    %c0_i32 = arith.constant 0 : i32
    %c0_i32_0 = arith.constant 0 : i32
    %c0_i32_1 = arith.constant 0 : i32
    return %c0_i32, %c0_i32_0 : i32, i32
  }
  func.func @transform_3(%arg0: i32) -> (i32, i32) {
    %c0_i32 = arith.constant 0 : i32
    %c0_i32_0 = arith.constant 0 : i32
    %c0_i32_1 = arith.constant 0 : i32
    return %c0_i32, %c0_i32_0 : i32, i32
  }
  func.func @transform_4(%arg0: i32) -> (i32, i32) {
    %c0_i32 = arith.constant 0 : i32
    %c0_i32_0 = arith.constant 0 : i32
    %c0_i32_1 = arith.constant 0 : i32
    return %c0_i32, %c0_i32_0 : i32, i32
  }
  func.func @transform_5(%arg0: i32) -> (i32, i32, i32) {
    %c0_i32 = arith.constant 0 : i32
    %c0_i32_0 = arith.constant 0 : i32
    %c0_i32_1 = arith.constant 0 : i32
    return %arg0, %c0_i32, %c0_i32_0 : i32, i32, i32
  }
}

</mosaic_0001>

<llo_original>
// kernel: tpu_custom_call.1
$region0: #{tpu_custom_call.1}
  #allocation0 [shape = 'u32[]', space=smem, size = 0x4, offset = 0x4, fixed_abs, tag = 'smem constant byte address 0x4 - core index']
  #allocation1 [shape = 'u32[144,128]{1,0:T(1,128)}', space=vmem, size = 0x12000, scoped, tag = 'internal scratch']
  #allocation2 [shape = 'f32[1,1]{1,0:T(1,128)S(1)}', space=vmem, size = 0x200, scoped, tag = 'scoped memory for tpu_custom_call.1']
  %s0 = inlined_call_operand.vmem [shape: bf16[512,32], index: 0, kind: input, shape index: {}]
  %s1 = inlined_call_operand.vmem [shape: bf16[80,32], index: 1, kind: input, shape index: {}]
  %s2 = inlined_call_operand.vmem [shape: f32[16,1], index: 2, kind: input, shape index: {}]
  %s3 = inlined_call_operand.vmem [shape: bf16[1,80], index: 3, kind: input, shape index: {}]
  %s4 = inlined_call_operand.<no memory space> [shape: f32[1,1], index: 4, kind: input, shape index: {}]
  %s5 = inlined_call_operand.hbm [shape: f32[4,1,128], index: 5, kind: output, shape index: {}]
  %s6 = sld [smem:[#allocation0]]
  $region53: #{tpu_custom_call.1} parent=0
    _
  %s8 = ssub.s32 1, %s6
  %s9 = scalar_select 0, %s8, %s6
  %v10 = vstv %s4
  %11 = vst [vmem:[#allocation2] sm:$0x1] %v10
  $region1: #{tpu_custom_call.1} parent=0
    #allocation3 [shape = 'u8[2048]{0}', space=vmem, size = 0x800, scoped, tag = 'output window, operand 0']
    #allocation4 [shape = 's32[2]{0}', space=sflag, size = 0x8, scoped, tag = 'scoped memory for tpu_custom_call.1']
    %12 = vsyncpa [#allocation4], 0
    %s13 = scalar_lea.sflag [#allocation4], 1
    %14 = vsyncpa %s13, 0
    loop: start=0, step=1, limit=4
    $region2: #{tpu_custom_call.1} parent=1 // loop_pre_header
      _
    $region3: #{tpu_custom_call.1} parent=1 // loop_header
      %s16 = sphi 0, %s20
      %p17 = scmp.ge.s32.totalorder %s16, 4
      %s26 = sphi 0, %s28
      %s29 = sphi 0, %s26
      %s30 = sphi 0, %s29
      %s46 = sphi 0, %s30
      %s50 = sphi 0, %s50
      %s52 = sphi 0, %s50
      %s53 = sphi 0, %s52
      %s67 = sphi 0, %s53
      %s71 = sphi 0, %s71
      %s73 = sphi 0, %s71
      %s74 = sphi 0, %s73
      %s88 = sphi 0, %s74
      %s92 = sphi 0, %s92
      %s94 = sphi 0, %s92
      %s95 = sphi 0, %s94
      %s109 = sphi 0, %s95
      %s113 = sphi 0, %s113
      %s115 = sphi 0, %s113
      %s116 = sphi 0, %s115
      %s130 = sphi 0, %s116
      %s136 = sphi 0, %s138
      %s139 = sphi 0, %s136
      %s140 = sphi 0, %s139
      %s156 = sphi 0, %s140
    $region4: #{tpu_custom_call.1} parent=1 // loop_header_branch
      %19 = sbr.rel (%p17) target = $region8
    $region5: #{tpu_custom_call.1} parent=1 // loop_body
      %s21 = ssub.s32 %s16, 1
      %s22 = ssub.s32 %s16, 2
      %s23 = sadd.s32 %s16, 1
      %s24 = ssub.s32 %s16, %s23
      %p25 = scmp.eq.s32.totalorder %s24, 0
      %s27 = sadd.s32 %s26, 1
      %s28 = scalar_select %p25, %s26, %s27
      %p31 = pneg %p25
      %p32 = scmp.eq.s32.totalorder %s16, 1
      %p33 = por %p31, %p32
      %p34 = scmp.ne.s32.totalorder %s26, %s29
      %p35 = scmp.eq.s32.totalorder %s16, 0
      %p36 = por %p34, %p35
      %p37 = scmp.ne.s32.totalorder %s26, %s29
      %p38 = scmp.eq.s32.totalorder %s21, 1
      %p39 = por %p37, %p38
      %p40 = scmp.ne.s32.totalorder %s29, %s30
      %p41 = scmp.eq.s32.totalorder %s21, 0
      %p42 = por %p40, %p41
      %p43 = scmp.ne.s32.totalorder %s29, %s30
      %p44 = scmp.eq.s32.totalorder %s22, 1
      %p45 = por %p43, %p44
      %p47 = scmp.ne.s32.totalorder %s30, %s46
      %p48 = scmp.eq.s32.totalorder %s22, 0
      %p49 = por %p47, %p48
      %s51 = sadd.s32 %s50, 1
      %p54 = scmp.eq.s32.totalorder %s16, 1
      %p55 = scmp.ne.s32.totalorder %s50, %s52
      %p56 = scmp.eq.s32.totalorder %s16, 0
      %p57 = por %p55, %p56
      %p58 = scmp.ne.s32.totalorder %s50, %s52
      %p59 = scmp.eq.s32.totalorder %s21, 1
      %p60 = por %p58, %p59
      %p61 = scmp.ne.s32.totalorder %s52, %s53
      %p62 = scmp.eq.s32.totalorder %s21, 0
      %p63 = por %p61, %p62
      %p64 = scmp.ne.s32.totalorder %s52, %s53
      %p65 = scmp.eq.s32.totalorder %s22, 1
      %p66 = por %p64, %p65
      %p68 = scmp.ne.s32.totalorder %s53, %s67
      %p69 = scmp.eq.s32.totalorder %s22, 0
      %p70 = por %p68, %p69
      %s72 = sadd.s32 %s71, 1
      %p75 = scmp.eq.s32.totalorder %s16, 1
      %p76 = scmp.ne.s32.totalorder %s71, %s73
      %p77 = scmp.eq.s32.totalorder %s16, 0
      %p78 = por %p76, %p77
      %p79 = scmp.ne.s32.totalorder %s71, %s73
      %p80 = scmp.eq.s32.totalorder %s21, 1
      %p81 = por %p79, %p80
      %p82 = scmp.ne.s32.totalorder %s73, %s74
      %p83 = scmp.eq.s32.totalorder %s21, 0
      %p84 = por %p82, %p83
      %p85 = scmp.ne.s32.totalorder %s73, %s74
      %p86 = scmp.eq.s32.totalorder %s22, 1
      %p87 = por %p85, %p86
      %p89 = scmp.ne.s32.totalorder %s74, %s88
      %p90 = scmp.eq.s32.totalorder %s22, 0
      %p91 = por %p89, %p90
      %s93 = sadd.s32 %s92, 1
      %p96 = scmp.eq.s32.totalorder %s16, 1
      %p97 = scmp.ne.s32.totalorder %s92, %s94
      %p98 = scmp.eq.s32.totalorder %s16, 0
      %p99 = por %p97, %p98
      %p100 = scmp.ne.s32.totalorder %s92, %s94
      %p101 = scmp.eq.s32.totalorder %s21, 1
      %p102 = por %p100, %p101
      %p103 = scmp.ne.s32.totalorder %s94, %s95
      %p104 = scmp.eq.s32.totalorder %s21, 0
      %p105 = por %p103, %p104
      %p106 = scmp.ne.s32.totalorder %s94, %s95
      %p107 = scmp.eq.s32.totalorder %s22, 1
      %p108 = por %p106, %p107
      %p110 = scmp.ne.s32.totalorder %s95, %s109
      %p111 = scmp.eq.s32.totalorder %s22, 0
      %p112 = por %p110, %p111
      %s114 = sadd.s32 %s113, 1
      %p117 = scmp.eq.s32.totalorder %s16, 1
      %p118 = scmp.ne.s32.totalorder %s113, %s115
      %p119 = scmp.eq.s32.totalorder %s16, 0
      %p120 = por %p118, %p119
      %p121 = scmp.ne.s32.totalorder %s113, %s115
      %p122 = scmp.eq.s32.totalorder %s21, 1
      %p123 = por %p121, %p122
      %p124 = scmp.ne.s32.totalorder %s115, %s116
      %p125 = scmp.eq.s32.totalorder %s21, 0
      %p126 = por %p124, %p125
      %p127 = scmp.ne.s32.totalorder %s115, %s116
      %p128 = scmp.eq.s32.totalorder %s22, 1
      %p129 = por %p127, %p128
      %p131 = scmp.ne.s32.totalorder %s116, %s130
      %p132 = scmp.eq.s32.totalorder %s22, 0
      %p133 = por %p131, %p132
      %s134 = ssub.s32 %s16, %s23
      %p135 = scmp.eq.s32.totalorder %s134, 0
      %s137 = sadd.s32 %s136, 1
      %s138 = scalar_select %p135, %s136, %s137
      %p141 = pneg %p135
      %p142 = scmp.eq.s32.totalorder %s16, 1
      %p143 = por %p141, %p142
      %p144 = scmp.ne.s32.totalorder %s136, %s139
      %p145 = scmp.eq.s32.totalorder %s16, 0
      %p146 = por %p144, %p145
      %p147 = scmp.ne.s32.totalorder %s136, %s139
      %p148 = scmp.eq.s32.totalorder %s21, 1
      %p149 = por %p147, %p148
      %p150 = scmp.ne.s32.totalorder %s139, %s140
      %p151 = scmp.eq.s32.totalorder %s21, 0
      %p152 = por %p150, %p151
      %p153 = scmp.ne.s32.totalorder %s139, %s140
      %p154 = scmp.eq.s32.totalorder %s22, 1
      %p155 = por %p153, %p154
      %p157 = scmp.ne.s32.totalorder %s140, %s156
      %p158 = scmp.eq.s32.totalorder %s22, 0
      %p159 = por %p157, %p158
      %p160 = scmp.le.s32.totalorder 1, %s16
      %p161 = scmp.lt.s32.totalorder %s16, 3
      %p162 = pnand %p160, %p161
      %p163 = pneg %p162
      // Predicated region
      $region9: #{tpu_custom_call.1} parent=5 // pred_check
        _
      $region10: #{tpu_custom_call.1} parent=5 // pred_check_branch
        %165 = sbr.rel (%p162) target = $region12
      $region11: #{tpu_custom_call.1} parent=5 // pred_region
        %s166 = ssub.s32 %s16, 1
        // Predicated region
        $region13: #{tpu_custom_call.1} parent=11 // pred_check
          %p167 = pneg %p63
        $region14: #{tpu_custom_call.1} parent=11 // pred_check_branch
          %169 = sbr.rel (%p167) target = $region16
        $region15: #{tpu_custom_call.1} parent=11 // pred_region
          _
        $region16: #{tpu_custom_call.1} parent=11 // pred_fallthru
          _
        // Predicated region
        $region17: #{tpu_custom_call.1} parent=11 // pred_check
          %p170 = pneg %p84
        $region18: #{tpu_custom_call.1} parent=11 // pred_check_branch
          %172 = sbr.rel (%p170) target = $region20
        $region19: #{tpu_custom_call.1} parent=11 // pred_region
          _
        $region20: #{tpu_custom_call.1} parent=11 // pred_fallthru
          _
        // Predicated region
        $region21: #{tpu_custom_call.1} parent=11 // pred_check
          %p173 = pneg %p105
        $region22: #{tpu_custom_call.1} parent=11 // pred_check_branch
          %175 = sbr.rel (%p173) target = $region24
        $region23: #{tpu_custom_call.1} parent=11 // pred_region
          _
        $region24: #{tpu_custom_call.1} parent=11 // pred_fallthru
          _
        // Predicated region
        $region25: #{tpu_custom_call.1} parent=11 // pred_check
          %p176 = pneg %p126
        $region26: #{tpu_custom_call.1} parent=11 // pred_check_branch
          %178 = sbr.rel (%p176) target = $region28
        $region27: #{tpu_custom_call.1} parent=11 // pred_region
          _
        $region28: #{tpu_custom_call.1} parent=11 // pred_fallthru
          _
      $region12: #{tpu_custom_call.1} parent=5 // pred_fallthru
        _
      %p179 = scmp.lt.s32.totalorder %s16, 2
      // Predicated region
      $region29: #{tpu_custom_call.1} parent=5 // pred_check
        %p180 = pneg %p179
      $region30: #{tpu_custom_call.1} parent=5 // pred_check_branch
        %182 = sbr.rel (%p180) target = $region32
      $region31: #{tpu_custom_call.1} parent=5 // pred_region
        // Predicated region
        $region33: #{tpu_custom_call.1} parent=31 // pred_check
          %p183 = pneg %p36
        $region34: #{tpu_custom_call.1} parent=31 // pred_check_branch
          %185 = sbr.rel (%p183) target = $region36
        $region35: #{tpu_custom_call.1} parent=31 // pred_region
          %s186 = smul.u32 32, %s16
          %p187 = scmp.lt.s32.totalorder %s186, 63
          %s188 = scalar_select %p187, %s186, 63
          %s189 = smul.addr %s188, 4
          %s190 = scalar_lea.vmem %s0, %s189
          %s191 = smul.u32 32, %s16
        $region36: #{tpu_custom_call.1} parent=31 // pred_fallthru
          _
      $region32: #{tpu_custom_call.1} parent=5 // pred_fallthru
        _
      %p192 = scmp.le.s32.totalorder 1, %s16
      %p193 = scmp.lt.s32.totalorder %s16, 3
      %p194 = pnand %p192, %p193
      %p195 = pneg %p194
      // Predicated region
      $region37: #{tpu_custom_call.1} parent=5 // pred_check
        _
      $region38: #{tpu_custom_call.1} parent=5 // pred_check_branch
        %197 = sbr.rel (%p194) target = $region40
      $region39: #{tpu_custom_call.1} parent=5 // pred_region
        %s198 = ssub.s32 %s16, 1
        %s199 = smul.u32 32, %s21
        %p200 = scmp.lt.s32.totalorder %s199, 63
        %s201 = scalar_select %p200, %s199, 63
        %s202 = smul.addr %s201, 4
        %s203 = scalar_lea.vmem %s0, %s202
        %p204 = pneg %p42
        %p205 = pneg %p39
        %p206 = pneg %p63
        %p207 = pneg %p60
        %p208 = pneg %p84
        %p209 = pneg %p81
        %p210 = pneg %p105
        %p211 = pneg %p102
        %p212 = pneg %p126
        %p213 = pneg %p123
        %p214 = pneg %p152
        %p215 = pneg %p149
        %s216 = sand.u32 %s139, 1
        %s217 = scalar_lea.sflag [#allocation4], %s216
        %s218 = sand.u32 %s139, 1
        %s219 = smul.addr %s218, 2
        %s220 = scalar_lea.vmem [#allocation3], %s219
        %s221 = smul.u32 32, %s21
        %p222 = scmp.lt.s32.totalorder %s221, 63
        %s223 = scalar_select %p222, %s221, 63
        %s224 = smul.addr %s223, 4
        %s225 = scalar_lea.vmem %s0, %s224
        %s226 = smul.u32 32, %s21
        %s227 = smul.u32 2, %s21
        %v229 = vld [vmem:[%s225] sm:$0xf]
        %v230 = vld [vmem:[%s225 + $0x4] sm:$0xf]
        %v231 = vld [vmem:[%s225 + $0x8] sm:$0xf]
        %v232 = vld [vmem:[%s225 + $0xc] sm:$0xf]
        %v233 = vld [vmem:[%s225 + $0x10] sm:$0xf]
        %v234 = vld [vmem:[%s225 + $0x14] sm:$0xf]
        %v235 = vld [vmem:[%s225 + $0x18] sm:$0xf]
        %v236 = vld [vmem:[%s225 + $0x1c] sm:$0xf]
        %v237 = vld [vmem:[%s225 + $0x20] sm:$0xf]
        %v238 = vld [vmem:[%s225 + $0x24] sm:$0xf]
        %v239 = vld [vmem:[%s225 + $0x28] sm:$0xf]
        %v240 = vld [vmem:[%s225 + $0x2c] sm:$0xf]
        %v241 = vld [vmem:[%s225 + $0x30] sm:$0xf]
        %v242 = vld [vmem:[%s225 + $0x34] sm:$0xf]
        %v243 = vld [vmem:[%s225 + $0x38] sm:$0xf]
        %v244 = vld [vmem:[%s225 + $0x3c] sm:$0xf]
        %v245 = vld [vmem:[%s225 + $0x40] sm:$0xf]
        %v246 = vld [vmem:[%s225 + $0x44] sm:$0xf]
        %v247 = vld [vmem:[%s225 + $0x48] sm:$0xf]
        %v248 = vld [vmem:[%s225 + $0x4c] sm:$0xf]
        %v249 = vld [vmem:[%s225 + $0x50] sm:$0xf]
        %v250 = vld [vmem:[%s225 + $0x54] sm:$0xf]
        %v251 = vld [vmem:[%s225 + $0x58] sm:$0xf]
        %v252 = vld [vmem:[%s225 + $0x5c] sm:$0xf]
        %v253 = vld [vmem:[%s225 + $0x60] sm:$0xf]
        %v254 = vld [vmem:[%s225 + $0x64] sm:$0xf]
        %v255 = vld [vmem:[%s225 + $0x68] sm:$0xf]
        %v256 = vld [vmem:[%s225 + $0x6c] sm:$0xf]
        %v257 = vld [vmem:[%s225 + $0x70] sm:$0xf]
        %v258 = vld [vmem:[%s225 + $0x74] sm:$0xf]
        %v259 = vld [vmem:[%s225 + $0x78] sm:$0xf]
        %v260 = vld [vmem:[%s225 + $0x7c] sm:$0xf]
        %v261 = vld [vmem:[%s1] sm:$0xf]
        %v262 = vld [vmem:[%s1 + $0x4] sm:$0xf]
        %v263 = vld [vmem:[%s1 + $0x8] sm:$0xf]
        %v264 = vld [vmem:[%s1 + $0xc] sm:$0xf]
        %v265 = vld [vmem:[%s1 + $0x10] sm:$0xf]
        %v266 = vld [vmem:[%s1 + $0x14] sm:$0xf]
        %v267 = vld [vmem:[%s1 + $0x18] sm:$0xf]
        %v268 = vld [vmem:[%s1 + $0x1c] sm:$0xf]
        %v269 = vld [vmem:[%s1 + $0x20] sm:$0xf]
        %v270 = vld [vmem:[%s1 + $0x24] sm:$0xf]
        %v271 = vld [vmem:[%s2] sm:$0xff]
        %v272 = vld [vmem:[%s2 + $0x8] sm:$0xff]
        %v273 = vld [vmem:[%s3] sm:$0x1]
        %v274 = vld [vmem:[#allocation2] sm:$0x1]
        %v285 = vunpack.c.l.b16 %v261
        %v286 = vunpack.c.l.b16 %v262
        %v287 = vunpack.c.l.b16 %v263
        %v288 = vunpack.c.l.b16 %v264
        %v289 = vunpack.c.l.b16 %v265
        %v290 = vunpack.c.l.b16 %v266
        %v291 = vunpack.c.l.b16 %v267
        %v292 = vunpack.c.l.b16 %v268
        %v293 = vunpack.c.l.b16 %v269
        %v294 = vunpack.c.l.b16 %v270
        %v295 = vpack.c.b16 %v286, %v285
        %v296 = vpack.c.b16 %v288, %v287
        %v297 = vpack.c.b16 %v290, %v289
        %v298 = vpack.c.b16 %v292, %v291
        %v299 = vpack.c.b16 %v294, %v293
        %v332 = vunpack.c.l.b16 %v229
        %v333 = vunpack.c.l.b16 %v230
        %v334 = vunpack.c.l.b16 %v231
        %v335 = vunpack.c.l.b16 %v232
        %v336 = vunpack.c.l.b16 %v233
        %v337 = vunpack.c.l.b16 %v234
        %v338 = vunpack.c.l.b16 %v235
        %v339 = vunpack.c.l.b16 %v236
        %v340 = vunpack.c.l.b16 %v237
        %v341 = vunpack.c.l.b16 %v238
        %v342 = vunpack.c.l.b16 %v239
        %v343 = vunpack.c.l.b16 %v240
        %v344 = vunpack.c.l.b16 %v241
        %v345 = vunpack.c.l.b16 %v242
        %v346 = vunpack.c.l.b16 %v243
        %v347 = vunpack.c.l.b16 %v244
        %v348 = vunpack.c.l.b16 %v245
        %v349 = vunpack.c.l.b16 %v246
        %v350 = vunpack.c.l.b16 %v247
        %v351 = vunpack.c.l.b16 %v248
        %v352 = vunpack.c.l.b16 %v249
        %v353 = vunpack.c.l.b16 %v250
        %v354 = vunpack.c.l.b16 %v251
        %v355 = vunpack.c.l.b16 %v252
        %v356 = vunpack.c.l.b16 %v253
        %v357 = vunpack.c.l.b16 %v254
        %v358 = vunpack.c.l.b16 %v255
        %v359 = vunpack.c.l.b16 %v256
        %v360 = vunpack.c.l.b16 %v257
        %v361 = vunpack.c.l.b16 %v258
        %v362 = vunpack.c.l.b16 %v259
        %v363 = vunpack.c.l.b16 %v260
        %v364 = vpack.c.b16 %v333, %v332
        %v365 = vpack.c.b16 %v335, %v334
        %v366 = vpack.c.b16 %v337, %v336
        %v367 = vpack.c.b16 %v339, %v338
        %v368 = vpack.c.b16 %v341, %v340
        %v369 = vpack.c.b16 %v343, %v342
        %v370 = vpack.c.b16 %v345, %v344
        %v371 = vpack.c.b16 %v347, %v346
        %v372 = vpack.c.b16 %v349, %v348
        %v373 = vpack.c.b16 %v351, %v350
        %v374 = vpack.c.b16 %v353, %v352
        %v375 = vpack.c.b16 %v355, %v354
        %v376 = vpack.c.b16 %v357, %v356
        %v377 = vpack.c.b16 %v359, %v358
        %v378 = vpack.c.b16 %v361, %v360
        %v379 = vpack.c.b16 %v363, %v362
        %vm380 = vcmask 261120
        %v382 = vsel %vm380, %v295, 0
        %v385 = vsel %vm380, %v296, 0
        %v388 = vsel %vm380, %v297, 0
        %v391 = vsel %vm380, %v298, 0
        %v394 = vsel %vm380, %v299, 0
        %v397 = vsel %vm380, %v364, 0
        %v400 = vsel %vm380, %v365, 0
        %v403 = vsel %vm380, %v366, 0
        %v406 = vsel %vm380, %v367, 0
        %v409 = vsel %vm380, %v368, 0
        %v412 = vsel %vm380, %v369, 0
        %v415 = vsel %vm380, %v370, 0
        %v418 = vsel %vm380, %v371, 0
        %v421 = vsel %vm380, %v372, 0
        %v424 = vsel %vm380, %v373, 0
        %v427 = vsel %vm380, %v374, 0
        %v430 = vsel %vm380, %v375, 0
        %v433 = vsel %vm380, %v376, 0
        %v436 = vsel %vm380, %v377, 0
        %v439 = vsel %vm380, %v378, 0
        %v442 = vsel %vm380, %v379, 0
        %444 = vmatprep.subr.bf16.mxu0 0
        %445 = vmatpush1.bf16.xpose.msra.mxu0 %v418
        %446 = vmatprep.subr.bf16.mxu0 0
        %447 = vmatpush1.bf16.xpose.msra.mxu0 %v415
        %448 = vmatprep.subr.bf16.mxu0 0
        %449 = vmatpush1.bf16.xpose.msra.mxu0 %v412
        %450 = vmatprep.subr.bf16.mxu0 0
        %451 = vmatpush1.bf16.xpose.msra.mxu0 %v409
        %452 = vmatprep.subr.bf16.mxu0 0
        %453 = vmatpush1.bf16.xpose.msra.mxu0 %v406
        %454 = vmatprep.subr.bf16.mxu0 0
        %455 = vmatpush1.bf16.xpose.msra.mxu0 %v403
        %456 = vmatprep.subr.bf16.mxu0 0
        %457 = vmatpush1.bf16.xpose.msra.mxu0 %v400
        %458 = vmatprep.subr.bf16.mxu0 0
        %459 = vmatpush1.bf16.xpose.msra.mxu0 %v397
        %460 = vmatprep.subr.bf16.mxu0 0
        %461 = vmatpush2.bf16.xpose.msra.mxu0 %v442
        %462 = vmatprep.subr.bf16.mxu0 0
        %463 = vmatpush2.bf16.xpose.msra.mxu0 %v439
        %464 = vmatprep.subr.bf16.mxu0 0
        %465 = vmatpush2.bf16.xpose.msra.mxu0 %v436
        %466 = vmatprep.subr.bf16.mxu0 0
        %467 = vmatpush2.bf16.xpose.msra.mxu0 %v433
        %468 = vmatprep.subr.bf16.mxu0 0
        %469 = vmatpush2.bf16.xpose.msra.mxu0 %v430
        %470 = vmatprep.subr.bf16.mxu0 0
        %471 = vmatpush2.bf16.xpose.msra.mxu0 %v427
        %472 = vmatprep.subr.bf16.mxu0 0
        %473 = vmatpush2.bf16.xpose.msra.mxu0 %v424
        %474 = vmatprep.subr.bf16.mxu0 0
        %475 = vmatpush2.bf16.xpose.msra.mxu0 %v421
        %476 = vmatprep.mubr.bf16.mxu0 0
        %477 = vmatmul.mubr.bf16.gmra.mxu0 %v382
        %v478 = vpop.f32.mrf.mxu0
        %v479 = vadd.f32 0.0, %v478
        %v480 = vpop.f32.mrf.mxu0
        %v481 = vadd.f32 0.0, %v480
        %v482 = vpop.f32.mrf.mxu0
        %v483 = vadd.f32 0.0, %v482
        %v484 = vpop.f32.mrf.mxu0
        %v485 = vadd.f32 0.0, %v484
        %486 = vmatprep.mubr.bf16.mxu0 0
        %487 = vmatmul.mubr.bf16.gmra.mxu0 %v385
        %v488 = vpop.f32.mrf.mxu0
        %v489 = vadd.f32 0.0, %v488
        %v490 = vpop.f32.mrf.mxu0
        %v491 = vadd.f32 0.0, %v490
        %v492 = vpop.f32.mrf.mxu0
        %v493 = vadd.f32 0.0, %v492
        %v494 = vpop.f32.mrf.mxu0
        %v495 = vadd.f32 0.0, %v494
        %496 = vmatprep.mubr.bf16.mxu0 0
        %497 = vmatmul.mubr.bf16.gmra.mxu0 %v388
        %v498 = vpop.f32.mrf.mxu0
        %v499 = vadd.f32 0.0, %v498
        %v500 = vpop.f32.mrf.mxu0
        %v501 = vadd.f32 0.0, %v500
        %v502 = vpop.f32.mrf.mxu0
        %v503 = vadd.f32 0.0, %v502
        %v504 = vpop.f32.mrf.mxu0
        %v505 = vadd.f32 0.0, %v504
        %506 = vmatprep.mubr.bf16.mxu0 0
        %507 = vmatmul.mubr.bf16.gmra.mxu0 %v391
        %v508 = vpop.f32.mrf.mxu0
        %v509 = vadd.f32 0.0, %v508
        %v510 = vpop.f32.mrf.mxu0
        %v511 = vadd.f32 0.0, %v510
        %v512 = vpop.f32.mrf.mxu0
        %v513 = vadd.f32 0.0, %v512
        %v514 = vpop.f32.mrf.mxu0
        %v515 = vadd.f32 0.0, %v514
        %516 = vmatprep.mubr.bf16.mxu0 0
        %517 = vmatmul.mubr.bf16.gmra.mxu0 %v394
        %v518 = vpop.f32.mrf.mxu0
        %v519 = vadd.f32 0.0, %v518
        %v520 = vpop.f32.mrf.mxu0
        %v521 = vadd.f32 0.0, %v520
        %v522 = vpop.f32.mrf.mxu0
        %v523 = vadd.f32 0.0, %v522
        %v524 = vpop.f32.mrf.mxu0
        %v525 = vadd.f32 0.0, %v524
        %526 = vdwg.mxu0
        %v527 = vlaneseq
        %v528 = vand.u32 %v527, 127
        %v529 = vadd.s32 %v528, 128
        %vm530 = vcmp.lt.s32.totalorder %v528, 0
        %v531 = vsub.s32 0, %v528
        %v532 = vsel %vm530, %v531, %v528
        %v533 = vshrl.u32 %v532, 7
        %v534 = vand.u32 %v532, 127
        %v535 = vsub.s32 0, %v534
        %v536 = vsel %vm530, %v535, %v534
        %vm537 = vcmp.lt.s32.totalorder %v529, 0
        %v538 = vsub.s32 0, %v529
        %v539 = vsel %vm537, %v538, %v529
        %v540 = vshrl.u32 %v539, 7
        %v541 = vand.u32 %v539, 127
        %v542 = vsub.s32 0, %v541
        %v543 = vsel %vm537, %v542, %v541
        %vm544 = vcmp.ne.s32.totalorder %v536, 0
        %vm545 = vcmp.ne.s32.totalorder %v543, 0
        %vm546 = vcmp.lt.s32.totalorder %v536, 0
        %vm547 = vcmp.lt.s32.totalorder %v543, 0
        %vm548 = vmand %vm546, %vm544
        %vm549 = vmand %vm547, %vm545
        %v550 = vadd.s32 %v536, 128
        %v551 = vadd.s32 %v543, 128
        %v552 = vsel %vm548, %v550, %v536
        %v553 = vsel %vm549, %v551, %v543
        %554 = vrot.lane.b32.xlu0 %v479, 2
        %v555 = vpop.permute.xlu0 %554
        %556 = vrot.lane.b32.xlu0 %v483, 2
        %v557 = vpop.permute.xlu0 %556
        %558 = vrot.lane.b32.xlu0 %v481, 2
        %v559 = vpop.permute.xlu0 %558
        %560 = vrot.lane.b32.xlu0 %v485, 2
        %v561 = vpop.permute.xlu0 %560
        %vm562 = vcmp.lt.s32.totalorder %v528, 2
        %v563 = vsel %vm562, %v555, %v559
        %v564 = vsel %vm562, %v557, %v561
        %v565 = vsel %vm562, %v559, %v555
        %v566 = vsel %vm562, %v561, %v557
        %v567 = vadd.s32 %v552, 4294967294
        %v568 = vadd.s32 %v553, 4294967294
        %vm569 = vcmp.ge.s32.totalorder %v567, 0
        %vm570 = vcmp.ge.s32.totalorder %v568, 0
        %vm571 = vcmp.lt.s32.totalorder %v567, 128
        %vm572 = vcmp.lt.s32.totalorder %v568, 128
        %vm573 = vmand %vm569, %vm571
        %vm574 = vmand %vm570, %vm572
        %v575 = vsel %vm573, 1, 0
        %v576 = vsel %vm574, 1, 0
        %vm577 = vcmp.eq.s32.totalorder %v575, 1
        %vm578 = vcmp.eq.s32.totalorder %v576, 1
        %v579 = vsel %vm577, %v565, 0.0
        %v580 = vsel %vm578, %v563, 0.0
        %v581 = vsel %vm577, %v566, 0.0
        %v582 = vsel %vm578, %v564, 0.0
        %584 = vset.pattern.permute.xlu0 0
        %585 = vperm.xlu0 %584, %v271
        %v586 = vpop.permute.xlu0 %585
        %589 = vset.pattern.permute.xlu0 0
        %590 = vperm.xlu0 %589, %v272
        %v591 = vpop.permute.xlu0 %590
        %v593 = vadd.f32 %v586, %v579
        %v594 = vadd.f32 %v586, %v580
        %v595 = vadd.f32 %v591, %v581
        %v596 = vadd.f32 %v591, %v582
        %597 = vrot.lane.b32.xlu0 %v489, 1
        %v598 = vpop.permute.xlu0 %597
        %599 = vrot.lane.b32.xlu0 %v493, 1
        %v600 = vpop.permute.xlu0 %599
        %601 = vrot.lane.b32.xlu0 %v491, 1
        %v602 = vpop.permute.xlu0 %601
        %603 = vrot.lane.b32.xlu0 %v495, 1
        %v604 = vpop.permute.xlu0 %603
        %vm605 = vcmp.lt.s32.totalorder %v528, 1
        %v606 = vsel %vm605, %v598, %v602
        %v607 = vsel %vm605, %v600, %v604
        %v608 = vsel %vm605, %v602, %v598
        %v609 = vsel %vm605, %v604, %v600
        %v610 = vadd.s32 %v552, 4294967295
        %v611 = vadd.s32 %v553, 4294967295
        %vm612 = vcmp.ge.s32.totalorder %v610, 0
        %vm613 = vcmp.ge.s32.totalorder %v611, 0
        %vm614 = vcmp.lt.s32.totalorder %v610, 128
        %vm615 = vcmp.lt.s32.totalorder %v611, 128
        %vm616 = vmand %vm612, %vm614
        %vm617 = vmand %vm613, %vm615
        %v618 = vsel %vm616, 1, 0
        %v619 = vsel %vm617, 1, 0
        %vm620 = vcmp.eq.s32.totalorder %v618, 1
        %vm621 = vcmp.eq.s32.totalorder %v619, 1
        %v622 = vsel %vm620, %v608, 0.0
        %v623 = vsel %vm621, %v606, 0.0
        %v624 = vsel %vm620, %v609, 0.0
        %v625 = vsel %vm621, %v607, 0.0
        %v626 = vadd.f32 %v593, %v622
        %v627 = vadd.f32 %v594, %v623
        %v628 = vadd.f32 %v595, %v624
        %v629 = vadd.f32 %v596, %v625
        %v630 = vadd.f32 %v626, %v499
        %v631 = vadd.f32 %v627, %v501
        %v632 = vadd.f32 %v628, %v503
        %v633 = vadd.f32 %v629, %v505
        %634 = vrot.lane.b32.xlu0 %v509, 127
        %v635 = vpop.permute.xlu0 %634
        %636 = vrot.lane.b32.xlu0 %v513, 127
        %v637 = vpop.permute.xlu0 %636
        %638 = vrot.lane.b32.xlu0 %v511, 127
        %v639 = vpop.permute.xlu0 %638
        %640 = vrot.lane.b32.xlu0 %v515, 127
        %v641 = vpop.permute.xlu0 %640
        %vm642 = vcmp.lt.s32.totalorder %v528, 127
        %v643 = vsel %vm642, %v635, %v639
        %v644 = vsel %vm642, %v637, %v641
        %v645 = vsel %vm642, %v639, %v635
        %v646 = vsel %vm642, %v641, %v637
        %v647 = vadd.s32 %v552, 1
        %v648 = vadd.s32 %v553, 1
        %vm649 = vcmp.ge.s32.totalorder %v647, 0
        %vm650 = vcmp.ge.s32.totalorder %v648, 0
        %vm651 = vcmp.lt.s32.totalorder %v647, 128
        %vm652 = vcmp.lt.s32.totalorder %v648, 128
        %vm653 = vmand %vm649, %vm651
        %vm654 = vmand %vm650, %vm652
        %v655 = vsel %vm653, 1, 0
        %v656 = vsel %vm654, 1, 0
        %vm657 = vcmp.eq.s32.totalorder %v655, 1
        %vm658 = vcmp.eq.s32.totalorder %v656, 1
        %v659 = vsel %vm657, %v643, 0.0
        %v660 = vsel %vm658, %v645, 0.0
        %v661 = vsel %vm657, %v644, 0.0
        %v662 = vsel %vm658, %v646, 0.0
        %v663 = vadd.f32 %v630, %v659
        %v664 = vadd.f32 %v631, %v660
        %v665 = vadd.f32 %v632, %v661
        %v666 = vadd.f32 %v633, %v662
        %667 = vrot.lane.b32.xlu0 %v519, 126
        %v668 = vpop.permute.xlu0 %667
        %669 = vrot.lane.b32.xlu0 %v523, 126
        %v670 = vpop.permute.xlu0 %669
        %671 = vrot.lane.b32.xlu0 %v521, 126
        %v672 = vpop.permute.xlu0 %671
        %673 = vrot.lane.b32.xlu0 %v525, 126
        %v674 = vpop.permute.xlu0 %673
        %vm675 = vcmp.lt.s32.totalorder %v528, 126
        %v676 = vsel %vm675, %v668, %v672
        %v677 = vsel %vm675, %v670, %v674
        %v678 = vsel %vm675, %v672, %v668
        %v679 = vsel %vm675, %v674, %v670
        %v680 = vadd.s32 %v552, 2
        %v681 = vadd.s32 %v553, 2
        %vm682 = vcmp.ge.s32.totalorder %v680, 0
        %vm683 = vcmp.ge.s32.totalorder %v681, 0
        %vm684 = vcmp.lt.s32.totalorder %v680, 128
        %vm685 = vcmp.lt.s32.totalorder %v681, 128
        %vm686 = vmand %vm682, %vm684
        %vm687 = vmand %vm683, %vm685
        %v688 = vsel %vm686, 1, 0
        %v689 = vsel %vm687, 1, 0
        %vm690 = vcmp.eq.s32.totalorder %v688, 1
        %vm691 = vcmp.eq.s32.totalorder %v689, 1
        %v692 = vsel %vm690, %v676, 0.0
        %v693 = vsel %vm691, %v678, 0.0
        %v694 = vsel %vm690, %v677, 0.0
        %v695 = vsel %vm691, %v679, 0.0
        %v696 = vadd.f32 %v663, %v692
        %v697 = vadd.f32 %v664, %v693
        %v698 = vadd.f32 %v665, %v694
        %v699 = vadd.f32 %v666, %v695
        %v700 = vtanh.pop %v696
        %v701 = vtanh.pop %v697
        %v702 = vtanh.pop %v698
        %v703 = vtanh.pop %v699
        %704 = vrot.lane.b32.xlu0 %v700, 2
        %v705 = vpop.permute.xlu0 %704
        %706 = vrot.lane.b32.xlu0 %v702, 2
        %v707 = vpop.permute.xlu0 %706
        %708 = vrot.lane.b32.xlu0 %v701, 2
        %v709 = vpop.permute.xlu0 %708
        %710 = vrot.lane.b32.xlu0 %v703, 2
        %v711 = vpop.permute.xlu0 %710
        %v712 = vsel %vm562, %v705, %v709
        %v713 = vsel %vm562, %v707, %v711
        %v714 = vsel %vm562, %v709, %v705
        %v715 = vsel %vm562, %v711, %v707
        %v716 = vsel %vm577, %v714, 0.0
        %v717 = vsel %vm578, %v712, 0.0
        %v718 = vsel %vm577, %v715, 0.0
        %v719 = vsel %vm578, %v713, 0.0
        %720 = vrot.lane.b32.xlu0 %v700, 1
        %v721 = vpop.permute.xlu0 %720
        %722 = vrot.lane.b32.xlu0 %v702, 1
        %v723 = vpop.permute.xlu0 %722
        %724 = vrot.lane.b32.xlu0 %v701, 1
        %v725 = vpop.permute.xlu0 %724
        %726 = vrot.lane.b32.xlu0 %v703, 1
        %v727 = vpop.permute.xlu0 %726
        %v728 = vsel %vm605, %v721, %v725
        %v729 = vsel %vm605, %v723, %v727
        %v730 = vsel %vm605, %v725, %v721
        %v731 = vsel %vm605, %v727, %v723
        %v732 = vsel %vm620, %v730, 0.0
        %v733 = vsel %vm621, %v728, 0.0
        %v734 = vsel %vm620, %v731, 0.0
        %v735 = vsel %vm621, %v729, 0.0
        %736 = vrot.lane.b32.xlu0 %v700, 127
        %v737 = vpop.permute.xlu0 %736
        %738 = vrot.lane.b32.xlu0 %v702, 127
        %v739 = vpop.permute.xlu0 %738
        %740 = vrot.lane.b32.xlu0 %v701, 127
        %v741 = vpop.permute.xlu0 %740
        %742 = vrot.lane.b32.xlu0 %v703, 127
        %v743 = vpop.permute.xlu0 %742
        %v744 = vsel %vm642, %v737, %v741
        %v745 = vsel %vm642, %v739, %v743
        %v746 = vsel %vm642, %v741, %v737
        %v747 = vsel %vm642, %v743, %v739
        %v748 = vsel %vm657, %v744, 0.0
        %v749 = vsel %vm658, %v746, 0.0
        %v750 = vsel %vm657, %v745, 0.0
        %v751 = vsel %vm658, %v747, 0.0
        %752 = vrot.lane.b32.xlu0 %v700, 126
        %v753 = vpop.permute.xlu0 %752
        %754 = vrot.lane.b32.xlu0 %v702, 126
        %v755 = vpop.permute.xlu0 %754
        %756 = vrot.lane.b32.xlu0 %v701, 126
        %v757 = vpop.permute.xlu0 %756
        %758 = vrot.lane.b32.xlu0 %v703, 126
        %v759 = vpop.permute.xlu0 %758
        %v760 = vsel %vm675, %v753, %v757
        %v761 = vsel %vm675, %v755, %v759
        %v762 = vsel %vm675, %v757, %v753
        %v763 = vsel %vm675, %v759, %v755
        %v764 = vsel %vm690, %v760, 0.0
        %v765 = vsel %vm691, %v762, 0.0
        %v766 = vsel %vm690, %v761, 0.0
        %v767 = vsel %vm691, %v763, 0.0
        %v768 = vpack.c.bf16 %v718, %v716
        %v769 = vpack.c.bf16 %v719, %v717
        %v770 = vpack.c.bf16 %v734, %v732
        %v771 = vpack.c.bf16 %v735, %v733
        %v772 = vpack.c.bf16 %v702, %v700
        %v773 = vpack.c.bf16 %v703, %v701
        %v774 = vpack.c.bf16 %v750, %v748
        %v775 = vpack.c.bf16 %v751, %v749
        %v776 = vpack.c.bf16 %v766, %v764
        %v777 = vpack.c.bf16 %v767, %v765
        %779 = vset.pattern.permute.xlu0 0
        %780 = vperm.xlu0 %779, %v274
        %v781 = vpop.permute.xlu0 %780
        %v783 = vlaneseq
        %v784 = vshrl.u32 %v783, 7
        %v785 = vsub.s32 0, %v784
        %v786 = vrot.slane %v781, %v785
        %vm787 = vcmask 654336
        %v789 = vsel %vm787, %v273, 0
        %791 = vmatprep.subr.bf16.mxu0 0
        %792 = vmatpush1.bf16.msra.mxu0 0
        %793 = vmatprep.subr.bf16.mxu0 0
        %794 = vmatpush1.bf16.msra.mxu0 0
        %795 = vmatprep.subr.bf16.mxu0 0
        %796 = vmatpush1.bf16.msra.mxu0 0
        %797 = vmatprep.subr.bf16.mxu0 %v777
        %798 = vmatpush1.bf16.msra.mxu0 %v776
        %799 = vmatprep.subr.bf16.mxu0 %v775
        %800 = vmatpush1.bf16.msra.mxu0 %v774
        %801 = vmatprep.subr.bf16.mxu0 %v773
        %802 = vmatpush1.bf16.msra.mxu0 %v772
        %803 = vmatprep.subr.bf16.mxu0 %v771
        %804 = vmatpush1.bf16.msra.mxu0 %v770
        %805 = vmatprep.subr.bf16.mxu0 %v769
        %806 = vmatpush1.bf16.msra.mxu0 %v768
        %807 = vmatprep.subr.bf16.mxu0 0
        %808 = vmatpush2.bf16.msra.mxu0 0
        %809 = vmatprep.subr.bf16.mxu0 0
        %810 = vmatpush2.bf16.msra.mxu0 0
        %811 = vmatprep.subr.bf16.mxu0 0
        %812 = vmatpush2.bf16.msra.mxu0 0
        %813 = vmatprep.subr.bf16.mxu0 0
        %814 = vmatpush2.bf16.msra.mxu0 0
        %815 = vmatprep.subr.bf16.mxu0 0
        %816 = vmatpush2.bf16.msra.mxu0 0
        %817 = vmatprep.subr.bf16.mxu0 0
        %818 = vmatpush2.bf16.msra.mxu0 0
        %819 = vmatprep.subr.bf16.mxu0 0
        %820 = vmatpush2.bf16.msra.mxu0 0
        %821 = vmatprep.subr.bf16.mxu0 0
        %822 = vmatpush2.bf16.msra.mxu0 0
        %823 = vmatprep.mubr.bf16.mxu0 0
        %824 = vmatmul.mubr.bf16.gmra.mxu0 %v789
        %v825 = vpop.f32.mrf.mxu0
        %v826 = vadd.f32 %v786, %v825
        %v827 = vpop.f32.mrf.mxu0
        %v828 = vadd.f32 %v786, %v827
        %v829 = vpop.f32.mrf.mxu0
        %v830 = vpop.f32.mrf.mxu0
        %831 = vdwg.mxu0
        %832 = vst [vmem:[%s220] sm:$0x1] %v826
        %833 = vst [vmem:[%s220 + $0x1] sm:$0x1] %v828
        %s834 = sand.u32 %s139, 1
        %s835 = scalar_lea.sflag [#allocation4], %s834
        %s836 = sand.u32 %s139, 1
        %s837 = smul.addr %s836, 2
        %s838 = scalar_lea.vmem [#allocation3], %s837
        // Predicated region
        $region41: #{tpu_custom_call.1} parent=39 // pred_check
          %p839 = pneg %p149
        $region42: #{tpu_custom_call.1} parent=39 // pred_check_branch
          %841 = sbr.rel (%p839) target = $region44
        $region43: #{tpu_custom_call.1} parent=39 // pred_region
          %s842 = smul.u32 2, %s21
          %s844 = ssub.s32 32, 32
          %845 = vsyncadd %s835, %s844
          %s846 = smul.addr %s842, 16
          %s847 = scalar_lea.hbm %s5, %s846
          %s848 = sshll.u32 %s838, 4
          %s849 = int_to_ptr.vmem [resolvable:$true] %s848
          %854 = dma.vmem_to_hbm [thread:$0]  %s849, 32, %s847, %s835, 16, 16, 1
        $region44: #{tpu_custom_call.1} parent=39 // pred_fallthru
          _
      $region40: #{tpu_custom_call.1} parent=5 // pred_fallthru
        _
      %p855 = scmp.le.s32.totalorder 2, %s16
      // Predicated region
      $region45: #{tpu_custom_call.1} parent=5 // pred_check
        %p856 = pneg %p855
      $region46: #{tpu_custom_call.1} parent=5 // pred_check_branch
        %858 = sbr.rel (%p856) target = $region48
      $region47: #{tpu_custom_call.1} parent=5 // pred_region
        %s859 = ssub.s32 %s16, 2
        // Predicated region
        $region49: #{tpu_custom_call.1} parent=47 // pred_check
          %p860 = pneg %p155
        $region50: #{tpu_custom_call.1} parent=47 // pred_check_branch
          %862 = sbr.rel (%p860) target = $region52
        $region51: #{tpu_custom_call.1} parent=47 // pred_region
          %s863 = sand.u32 %s140, 1
          %s864 = scalar_lea.sflag [#allocation4], %s863
          %s865 = sand.u32 %s140, 1
          %s866 = smul.addr %s865, 2
          %s867 = scalar_lea.vmem [#allocation3], %s866
          %868 = dma.done %s864, 32
        $region52: #{tpu_custom_call.1} parent=47 // pred_fallthru
          _
      $region48: #{tpu_custom_call.1} parent=5 // pred_fallthru
        _
    $region6: #{tpu_custom_call.1} parent=1 // loop_footer
      %s20 = sadd.s32 1, %s16
    $region7: #{tpu_custom_call.1} parent=1 // loop_footer_branch
      %15 = sbr.rel target = $region3
    $region8: #{tpu_custom_call.1} parent=1 // loop_exit
      _
    %869 = vsyncpa [#allocation4], 1
    %s870 = scalar_lea.sflag [#allocation4], 1
    %871 = vsyncpa %s870, 1

</llo_original>
